<compile_context>
chip_gen: v7x
topology: tpu7x:2x2x1
jax: 0.10.0
libtpu: 0.0.40
codegen_flags: <defaults>
</compile_context>

<pallas_src>
import functools
import math

import jax
import jax.numpy as jnp
from jax.experimental import pallas as pl
from jax.experimental.pallas import tpu as pltpu


# ---------------------------------------------------------------------------
# helpers
# ---------------------------------------------------------------------------
def _round_up(n, m):
    return ((n + m - 1) // m) * m


def _tpu_generation():
    try:
        kind = jax.devices()[0].device_kind.lower()
    except Exception:
        kind = ""
    if "v5 lite" in kind or "v5lite" in kind or "v5e" in kind:
        return "v5e"
    if "v6" in kind:
        return "v6e"
    if "v7" in kind:
        return "v7x"
    return "other"


# Generation-gated constants:
#   vmem_cap : VMEM limit handed to Mosaic (physical minus headroom)
#   max_w    : budget for resident weight buffers (drives grid_h==1 vs th)
#   step     : preferred contraction-tile multiple (256 on v6e/v7x, 128 v5e)
#   max_tm   : row-tile ceiling used when minimizing weight re-streaming
#   two_tc   : shard the M axis across 2 TensorCores (v7x)
_GEN_CFG = {
    "v5e":   dict(vmem_cap=100 << 20, max_w=56 << 20, step=128, max_tm=1024, two_tc=False),
    "v6e":   dict(vmem_cap=100 << 20, max_w=56 << 20, step=256, max_tm=1024, two_tc=False),
    "v7x":   dict(vmem_cap=48 << 20,  max_w=24 << 20, step=256, max_tm=512,  two_tc=True),
    "other": dict(vmem_cap=64 << 20,  max_w=32 << 20, step=128, max_tm=512,  two_tc=False),
}


@functools.lru_cache(maxsize=None)
def _single_buffer_supported():
    """Probe (once) whether pl.Buffered(1) single-buffering lowers on this
    jax/libtpu by compiling a tiny dedicated pallas_call."""
    if not hasattr(pl, "Buffered"):
        return False
    try:
        def k(a_ref, c_ref, o_ref):
            o_ref[...] = a_ref[...] + c_ref[...]

        out = pl.pallas_call(
            k,
            out_shape=jax.ShapeDtypeStruct((8, 128), jnp.float32),
            grid_spec=pltpu.PrefetchScalarGridSpec(
                num_scalar_prefetch=0,
                grid=(2,),
                in_specs=[
                    pl.BlockSpec((8, 128), lambda i: (0, 0)),
                    pl.BlockSpec((8, 128), lambda i: (0, 0),
                                 pipeline_mode=pl.Buffered(1)),
                ],
                out_specs=pl.BlockSpec((8, 128), lambda i: (0, 0)),
            ),
        )(jnp.zeros((8, 128), jnp.float32), jnp.ones((8, 128), jnp.float32))
        jax.block_until_ready(out)
        return True
    except Exception:  # probe only -- never masks errors in the real kernel
        return False


# ---------------------------------------------------------------------------
# kernels
# ---------------------------------------------------------------------------
def _ffn_kernel_fused(x_ref, w1_ref, b1_ref, w2_ref, b2_ref, o_ref):
    """grid = (M/tm,): whole hidden dim resident -> no accumulator scratch,
    single store to o_ref per row tile."""
    h = jnp.dot(x_ref[...].astype(w1_ref.dtype), w1_ref[...],
                preferred_element_type=jnp.float32)
    h = jnp.maximum(h + b1_ref[...], 0.0)
    # TODO(synk): relu_dropout > 0 (training mode) would need pltpu.prng_seed
    # + pltpu.prng_random_bits here; the module default p=0.0 is the identity.
    y = jnp.dot(h.astype(w2_ref.dtype), w2_ref[...],
                preferred_element_type=jnp.float32)
    o_ref[...] = (y + b2_ref[...]).astype(o_ref.dtype)


def _ffn_kernel_acc(x_ref, w1_ref, b1_ref, w2_ref, b2_ref, o_ref, acc_ref):
    """grid = (M/tm, H/th): hidden axis last / 'arbitrary'; the second matmul
    is accumulated into f32 VMEM scratch.  The first hidden step ASSIGNS (no
    zero-init pass); the last step adds the output bias and stores."""
    j = pl.program_id(1)
    h = jnp.dot(x_ref[...].astype(w1_ref.dtype), w1_ref[...],
                preferred_element_type=jnp.float32)
    h = jnp.maximum(h + b1_ref[...], 0.0)
    # TODO(synk): training-mode relu_dropout (p > 0) not implemented.
    part = jnp.dot(h.astype(w2_ref.dtype), w2_ref[...],
                   preferred_element_type=jnp.float32)

    @pl.when(j == 0)
    def _():
        acc_ref[...] = part

    @pl.when(j > 0)
    def _():
        acc_ref[...] += part

    @pl.when(j == pl.num_programs(1) - 1)
    def _():
        o_ref[...] = (acc_ref[...] + b2_ref[...]).astype(o_ref.dtype)


# ---------------------------------------------------------------------------
# factory / wrapper
# ---------------------------------------------------------------------------
def make_transformer_ffn(w1, b1, w2, b2, *, compute_dtype=jnp.bfloat16,
                         tm=None, th=None):
    """Returns a cached callable ffn(x) for x: (batch, seq, dim).

    w1 = lin1.weight.T (dim, dim_hidden), b1 = lin1.bias,
    w2 = lin2.weight.T (dim_hidden, dim), b2 = lin2.bias.

    Weights/biases are padded to lane multiples and cast to `compute_dtype`
    ONCE here (MXU inputs; accumulation + bias/ReLU stay f32).  The bf16
    default is an explicit accuracy/speed choice -- pass
    compute_dtype=jnp.float32 for exact f32 matmuls.
    """
    dim, dim_hidden = w1.shape
    assert b1.shape == (dim_hidden,) and w2.shape == (dim_hidden, dim) \
        and b2.shape == (dim,)

    cfg = _GEN_CFG[_tpu_generation()]
    cbytes = jnp.dtype(compute_dtype).itemsize
    single_w = _single_buffer_supported()

    dim_p = _round_up(dim, 128)
    dh_p = _round_up(dim_hidden, 128)
    pad_features = dim_p != dim

    # ---- pad + cast parameters once (exact: zero rows/cols contribute 0).
    if dim_p == dim and dh_p == dim_hidden and w1.dtype == jnp.dtype(compute_dtype):
        w1_p, w2_p = w1, w2
    else:
        w1_p = jnp.zeros((dim_p, dh_p), compute_dtype).at[:dim, :dim_hidden].set(
            w1.astype(compute_dtype))
        w2_p = jnp.zeros((dh_p, dim_p), compute_dtype).at[:dim_hidden, :dim].set(
            w2.astype(compute_dtype))
    b1_p = jnp.zeros((1, dh_p), jnp.float32).at[0, :dim_hidden].set(
        b1.astype(jnp.float32))
    b2_p = jnp.zeros((1, dim_p), jnp.float32).at[0, :dim].set(
        b2.astype(jnp.float32))

    # ---- hidden tiling: keep the full weights resident (grid_h == 1)
    #      whenever their buffers fit the generation's weight budget.
    full_w_bytes = 2 * dim_p * dh_p * cbytes              # w1 + w2, one copy
    if th is None:
        if (1 if single_w else 2) * full_w_bytes <= cfg["max_w"]:
            th_sel = dh_p
        else:
            th_sel = None
            steps = (256, 128) if cfg["step"] == 256 else (128,)
            for stp in steps:
                for c in range(dh_p // stp, 0, -1):
                    cand = c * stp
                    # hidden-tiled w1/w2 blocks are double-buffered
                    if dh_p % cand == 0 and 4 * dim_p * cand * cbytes <= cfg["max_w"]:
                        th_sel = cand
                        break
                if th_sel is not None:
                    break
            if th_sel is None:
                th_sel = 128
    else:
        th_sel = th
    assert th_sel % 128 == 0 and dh_p % th_sel == 0
    grid_h = dh_p // th_sel

    def _vmem_estimate(t, xb, ob):
        wbuf = 1 if (grid_h == 1 and single_w) else 2
        est = (2 * t * dim_p * xb                          # x tile, 2 buffers
               + 2 * t * dim_p * ob                        # out tile, 2 buffers
               + wbuf * 2 * dim_p * th_sel * cbytes        # w1 + w2 blocks
               + wbuf * 8 * (th_sel + dim_p) * 4           # biases (8-sublane pad)
               + t * th_sel * 4)                           # h intermediate (f32)
        if grid_h > 1:
            est += t * dim_p * 4                           # f32 accumulator
        return est

    def _choose_tm(M, xb, ob):
        if tm is not None:
            t = tm
        else:
            if grid_h > 1:
                # Weights are re-streamed once per row tile -> minimize grid_m.
                t = cfg["max_tm"]
            else:
                t = 512 if M >= 1024 else 256
            if cfg["two_tc"] and M >= 256:
                # Keep >= 2 row tiles so both v7x TensorCores get work.
                t = min(t, max(128, _round_up(pl.cdiv(M, 2), 128)))
        t = max(8, min(_round_up(t, 8), _round_up(M, 8)))
        while t > 64 and _vmem_estimate(t, xb, ob) + (6 << 20) > cfg["vmem_cap"]:
            t = max(64, _round_up(t // 2, 8))
        return t

    @functools.lru_cache(maxsize=None)
    def _build(M, x_dtype_name, out_dtype_name):
        xb = jnp.dtype(x_dtype_name).itemsize
        ob = jnp.dtype(out_dtype_name).itemsize
        t = _choose_tm(M, xb, ob)
        grid_m = pl.cdiv(M, t)

        est = _vmem_estimate(t, xb, ob)
        vmem_limit = int(min(cfg["vmem_cap"],
                             max(int(est * 1.25) + (8 << 20), 32 << 20)))

        cost = pl.CostEstimate(
            flops=4 * M * dim_p * dh_p,
            transcendentals=0,
            bytes_accessed=(M * dim_p * xb + full_w_bytes
                            + 4 * (dh_p + dim_p) + M * dim_p * ob),
        )

        def wspec(shape, index_map):
            # Constant-index operands: single-buffer when supported.
            if single_w:
                return pl.BlockSpec(shape, index_map,
                                    pipeline_mode=pl.Buffered(1))
            return pl.BlockSpec(shape, index_map)

        if grid_h == 1:
            grid = (grid_m,)
            in_specs = [
                pl.BlockSpec((t, dim_p), lambda i: (i, 0)),      # x row tile
                wspec((dim_p, dh_p), lambda i: (0, 0)),          # w1 (resident)
                wspec((1, dh_p), lambda i: (0, 0)),              # b1
                wspec((dh_p, dim_p), lambda i: (0, 0)),          # w2 (resident)
                wspec((1, dim_p), lambda i: (0, 0)),             # b2
            ]
            out_specs = pl.BlockSpec((t, dim_p), lambda i: (i, 0))
            scratch = ()
            kernel = _ffn_kernel_fused
            dims = ("parallel",)
        else:
            grid = (grid_m, grid_h)
            in_specs = [
                pl.BlockSpec((t, dim_p), lambda i, j: (i, 0)),       # x row tile
                pl.BlockSpec((dim_p, th_sel), lambda i, j: (0, j)),  # w1 tile
                pl.BlockSpec((1, th_sel), lambda i, j: (0, j)),      # b1 tile
                pl.BlockSpec((th_sel, dim_p), lambda i, j: (j, 0)),  # w2 tile
                wspec((1, dim_p), lambda i, j: (0, 0)),              # b2
            ]
            out_specs = pl.BlockSpec((t, dim_p), lambda i, j: (i, 0))
            scratch = (pltpu.VMEM((t, dim_p), jnp.float32),)
            kernel = _ffn_kernel_acc
            dims = ("parallel", "arbitrary")

        return pl.pallas_call(
            kernel,
            out_shape=jax.ShapeDtypeStruct((M, dim_p), jnp.dtype(out_dtype_name)),
            grid_spec=pltpu.PrefetchScalarGridSpec(
                num_scalar_prefetch=0,
                grid=grid,
                in_specs=in_specs,
                out_specs=out_specs,
                scratch_shapes=scratch,
            ),
            compiler_params=pltpu.CompilerParams(
                dimension_semantics=dims,
                vmem_limit_bytes=vmem_limit,
            ),
            cost_estimate=cost,
        )

    def ffn(x):
        batch, seq, d = x.shape
        assert d == dim, f"expected last dim {dim}, got {d}"
        M = batch * seq
        out_dtype = x.dtype
        x2d = x.reshape(M, dim)
        if pad_features:
            # Pad the feature axis to a lane multiple, casting while padding
            # (one fused copy).  Ragged M needs NO padding: the grid's partial
            # last row block is masked on store and rows never mix.
            x2d = jnp.zeros((M, dim_p), compute_dtype).at[:, :dim].set(
                x2d.astype(compute_dtype))
        call = _build(M, jnp.dtype(x2d.dtype).name, jnp.dtype(out_dtype).name)
        out = call(x2d, w1_p, b1_p, w2_p, b2_p)
        if pad_features:
            out = out[:, :dim]
        return out.reshape(batch, seq, dim)

    return ffn


def transformer_ffn(x, w1, b1, w2, b2, **kwargs):
    """One-shot convenience wrapper.  Prefer make_transformer_ffn() so the
    padded/cast weights are built once and reused across calls."""
    return make_transformer_ffn(w1, b1, w2, b2, **kwargs)(x)


# ---------------------------------------------------------------------------
# init + references
# ---------------------------------------------------------------------------
def init_params(key, dim, dim_hidden, dtype=jnp.float32):
    """nn.Linear + xavier_uniform_ on weights (weights stored transposed)."""
    k1, k2, k3, k4 = jax.random.split(key, 4)
    a1 = math.sqrt(6.0 / (dim + dim_hidden))
    w1 = jax.random.uniform(k1, (dim, dim_hidden), dtype, -a1, a1)   # lin1.W.T
    a2 = math.sqrt(6.0 / (dim_hidden + dim))
    w2 = jax.random.uniform(k2, (dim_hidden, dim), dtype, -a2, a2)   # lin2.W.T
    bb1 = 1.0 / math.sqrt(dim)
    b1 = jax.random.uniform(k3, (dim_hidden,), dtype, -bb1, bb1)
    bb2 = 1.0 / math.sqrt(dim_hidden)
    b2 = jax.random.uniform(k4, (dim,), dtype, -bb2, bb2)
    return w1, b1, w2, b2


def ref_f32(x, w1, b1, w2, b2):
    return jnp.maximum(x @ w1 + b1, 0.0) @ w2 + b2


def ref_matched(x, w1, b1, w2, b2, cdt=jnp.bfloat16):
    """Pure-JAX reference with the kernel's bf16-input / f32-accum numerics."""
    h = jnp.dot(x.astype(cdt), w1.astype(cdt),
                preferred_element_type=jnp.float32)
    h = jnp.maximum(h + b1.astype(jnp.float32), 0.0)
    y = jnp.dot(h.astype(cdt), w2.astype(cdt),
                preferred_element_type=jnp.float32)
    return (y + b2.astype(jnp.float32)).astype(x.dtype)


# ---------------------------------------------------------------------------
# demo / self-check
# ---------------------------------------------------------------------------
if __name__ == "__main__":
    key = jax.random.PRNGKey(0)

    # --- config 1: the module's small demo shapes (fused grid_h == 1 path,
    #     feature dims padded to 128, ragged M via partial last block)
    batch, seq, dim, dim_hidden = 2, 8, 32, 64
    kx, kp, key = jax.random.split(key, 3)
    x = jax.random.normal(kx, (batch, seq, dim), jnp.float32)
    w1, b1, w2, b2 = init_params(kp, dim, dim_hidden)

    ffn = make_transformer_ffn(w1, b1, w2, b2)          # weights padded once
    out = jax.block_until_ready(ffn(x))
    assert out.shape == (batch, seq, dim)
    rm = ref_matched(x, w1, b1, w2, b2)
    r32 = ref_f32(x, w1, b1, w2, b2)
    assert jnp.allclose(out, rm, atol=1e-2, rtol=1e-2), \
        float(jnp.max(jnp.abs(out - rm)))
    assert jnp.allclose(out, r32, atol=1e-1, rtol=1e-1), \
        float(jnp.max(jnp.abs(out - r32)))
    out_again = jax.block_until_ready(ffn(x))           # cached build path
    assert jnp.allclose(out_again, out)

    # --- config 2: ragged M + padded feature dims + hidden-dim accumulation
    #     (M=30 ragged, dim=96->128, dim_hidden=200->256, th=128 -> grid_h=2
    #      exercises the f32 accumulator kernel with assign-on-first-step)
    batch2, seq2, dim2, dh2 = 3, 10, 96, 200
    kx2, kp2 = jax.random.split(key, 2)
    x2 = jax.random.normal(kx2, (batch2, seq2, dim2), jnp.float32)
    p2 = init_params(kp2, dim2, dh2)
    ffn2 = make_transformer_ffn(*p2, tm=16, th=128)
    out2 = jax.block_until_ready(ffn2(x2))
    assert out2.shape == (batch2, seq2, dim2)
    rm2 = ref_matched(x2, *p2)
    assert jnp.allclose(out2, rm2, atol=1e-2, rtol=1e-2), \
        float(jnp.max(jnp.abs(out2 - rm2)))

    print("KERNEL_OK")
</pallas_src>

<mosaic_0001>
module attributes {stable_mosaic.version = 11 : i64} {
  func.func @k(%arg0: i32, %arg1: memref<8x128xf32, #tpu.memory_space<vmem>>, %arg2: memref<8x128xf32, #tpu.memory_space<vmem>>, %arg3: memref<8x128xf32, #tpu.memory_space<vmem>>) attributes {dimension_semantics = [#tpu.dimension_semantics<arbitrary>], iteration_bounds = array<i64: 2>, scalar_prefetch = 0 : i64, scratch_operands = 0 : i64, tpu.core_type = #tpu.core_type<tc>, window_params = [{pipeline_mode = #tpu.pipeline_mode<synchronous>, transform_indices = @transform_0, window_bounds = array<i64: 8, 128>}, {pipeline_mode = #tpu.pipeline_mode<synchronous>, transform_indices = @transform_1, window_bounds = array<i64: 8, 128>}, {pipeline_mode = #tpu.pipeline_mode<synchronous>, transform_indices = @transform_2, window_bounds = array<i64: 8, 128>}]} {
    %c0 = arith.constant 0 : index
    %c0_0 = arith.constant 0 : index
    %0 = vector.load %arg1[%c0, %c0_0] : memref<8x128xf32, #tpu.memory_space<vmem>>, vector<8x128xf32>
    %c0_1 = arith.constant 0 : index
    %c0_2 = arith.constant 0 : index
    %1 = vector.load %arg2[%c0_1, %c0_2] : memref<8x128xf32, #tpu.memory_space<vmem>>, vector<8x128xf32>
    %2 = arith.addf %0, %1 : vector<8x128xf32>
    %c0_3 = arith.constant 0 : index
    %c0_4 = arith.constant 0 : index
    %3 = vector.load %arg3[%c0_3, %c0_4] : memref<8x128xf32, #tpu.memory_space<vmem>>, vector<8x128xf32>
    tpu.vector_store %arg3[%c0_3, %c0_4], %2 {strides = array<i32>} : memref<8x128xf32, #tpu.memory_space<vmem>>, vector<8x128xf32>,
    return
  }
  func.func @transform_0(%arg0: i32) -> (i32, i32) {
    %c0_i32 = arith.constant 0 : i32
    %c0_i32_0 = arith.constant 0 : i32
    %c0_i32_1 = arith.constant 0 : i32
    return %c0_i32, %c0_i32_0 : i32, i32
  }
  func.func @transform_1(%arg0: i32) -> (i32, i32) {
    %c0_i32 = arith.constant 0 : i32
    %c0_i32_0 = arith.constant 0 : i32
    %c0_i32_1 = arith.constant 0 : i32
    return %c0_i32, %c0_i32_0 : i32, i32
  }
  func.func @transform_2(%arg0: i32) -> (i32, i32) {
    %c0_i32 = arith.constant 0 : i32
    %c0_i32_0 = arith.constant 0 : i32
    %c0_i32_1 = arith.constant 0 : i32
    return %c0_i32, %c0_i32_0 : i32, i32
  }
}

module attributes {stable_mosaic.version = 11 : i64} {
  func.func @_ffn_kernel_fused(%arg0: i32, %arg1: memref<16x128xbf16, #tpu.memory_space<vmem>>, %arg2: memref<128x128xbf16, #tpu.memory_space<vmem>>, %arg3: memref<1x128xf32, #tpu.memory_space<vmem>>, %arg4: memref<128x128xbf16, #tpu.memory_space<vmem>>, %arg5: memref<1x128xf32, #tpu.memory_space<vmem>>, %arg6: memref<16x128xf32, #tpu.memory_space<vmem>>) attributes {dimension_semantics = [#tpu.dimension_semantics<parallel>], iteration_bounds = array<i64: 1>, scalar_prefetch = 0 : i64, scratch_operands = 0 : i64, tpu.core_type = #tpu.core_type<tc>, window_params = [{transform_indices = @transform_0, window_bounds = array<i64: 16, 128>}, {pipeline_mode = #tpu.pipeline_mode<synchronous>, transform_indices = @transform_1, window_bounds = array<i64: 128, 128>}, {pipeline_mode = #tpu.pipeline_mode<synchronous>, transform_indices = @transform_2, window_bounds = array<i64: 1, 128>}, {pipeline_mode = #tpu.pipeline_mode<synchronous>, transform_indices = @transform_3, window_bounds = array<i64: 128, 128>}, {pipeline_mode = #tpu.pipeline_mode<synchronous>, transform_indices = @transform_4, window_bounds = array<i64: 1, 128>}, {transform_indices = @transform_5, window_bounds = array<i64: 16, 128>}]} {
    %c0 = arith.constant 0 : index
    %c0_0 = arith.constant 0 : index
    %0 = vector.load %arg1[%c0, %c0_0] : memref<16x128xbf16, #tpu.memory_space<vmem>>, vector<16x128xbf16>
    %c0_1 = arith.constant 0 : index
    %c0_2 = arith.constant 0 : index
    %1 = vector.load %arg2[%c0_1, %c0_2] : memref<128x128xbf16, #tpu.memory_space<vmem>>, vector<128x128xbf16>
    %cst = arith.constant dense<0.000000e+00> : vector<16x128xf32>
    %2 = tpu.matmul %0, %1, %cst {dimension_numbers = #tpu.dot_dimension_numbers<[1], [0], [0], [1], [0, 0, 1, 1], [], []>} : vector<16x128xbf16>, vector<128x128xbf16>, vector<16x128xf32> -> vector<16x128xf32>
    %c0_3 = arith.constant 0 : index
    %c0_4 = arith.constant 0 : index
    %3 = vector.load %arg3[%c0_3, %c0_4] : memref<1x128xf32, #tpu.memory_space<vmem>>, vector<1x128xf32>
    %4 = vector.broadcast %3 : vector<1x128xf32> to vector<16x128xf32>
    %5 = arith.addf %2, %4 : vector<16x128xf32>
    %cst_5 = arith.constant 0.000000e+00 : f32
    %6 = vector.broadcast %cst_5 : f32 to vector<16x128xf32>
    %7 = arith.maximumf %5, %6 : vector<16x128xf32>
    %8 = arith.truncf %7 : vector<16x128xf32> to vector<16x128xbf16>
    %c0_6 = arith.constant 0 : index
    %c0_7 = arith.constant 0 : index
    %9 = vector.load %arg4[%c0_6, %c0_7] : memref<128x128xbf16, #tpu.memory_space<vmem>>, vector<128x128xbf16>
    %cst_8 = arith.constant dense<0.000000e+00> : vector<16x128xf32>
    %10 = tpu.matmul %8, %9, %cst_8 {dimension_numbers = #tpu.dot_dimension_numbers<[1], [0], [0], [1], [0, 0, 1, 1], [], []>} : vector<16x128xbf16>, vector<128x128xbf16>, vector<16x128xf32> -> vector<16x128xf32>
    %c0_9 = arith.constant 0 : index
    %c0_10 = arith.constant 0 : index
    %11 = vector.load %arg5[%c0_9, %c0_10] : memref<1x128xf32, #tpu.memory_space<vmem>>, vector<1x128xf32>
    %12 = vector.broadcast %11 : vector<1x128xf32> to vector<16x128xf32>
    %13 = arith.addf %10, %12 : vector<16x128xf32>
    %c0_11 = arith.constant 0 : index
    %c0_12 = arith.constant 0 : index
    %14 = vector.load %arg6[%c0_11, %c0_12] : memref<16x128xf32, #tpu.memory_space<vmem>>, vector<16x128xf32>
    tpu.vector_store %arg6[%c0_11, %c0_12], %13 {strides = array<i32>} : memref<16x128xf32, #tpu.memory_space<vmem>>, vector<16x128xf32>,
    return
  }
  func.func @transform_0(%arg0: i32) -> (i32, i32) {
    %c0_i32 = arith.constant 0 : i32
    %c0_i32_0 = arith.constant 0 : i32
    return %arg0, %c0_i32 : i32, i32
  }
  func.func @transform_1(%arg0: i32) -> (i32, i32) {
    %c0_i32 = arith.constant 0 : i32
    %c0_i32_0 = arith.constant 0 : i32
    %c0_i32_1 = arith.constant 0 : i32
    return %c0_i32, %c0_i32_0 : i32, i32
  }
  func.func @transform_2(%arg0: i32) -> (i32, i32) {
    %c0_i32 = arith.constant 0 : i32
    %c0_i32_0 = arith.constant 0 : i32
    %c0_i32_1 = arith.constant 0 : i32
    return %c0_i32, %c0_i32_0 : i32, i32
  }
  func.func @transform_3(%arg0: i32) -> (i32, i32) {
    %c0_i32 = arith.constant 0 : i32
    %c0_i32_0 = arith.constant 0 : i32
    %c0_i32_1 = arith.constant 0 : i32
    return %c0_i32, %c0_i32_0 : i32, i32
  }
  func.func @transform_4(%arg0: i32) -> (i32, i32) {
    %c0_i32 = arith.constant 0 : i32
    %c0_i32_0 = arith.constant 0 : i32
    %c0_i32_1 = arith.constant 0 : i32
    return %c0_i32, %c0_i32_0 : i32, i32
  }
  func.func @transform_5(%arg0: i32) -> (i32, i32) {
    %c0_i32 = arith.constant 0 : i32
    %c0_i32_0 = arith.constant 0 : i32
    return %arg0, %c0_i32 : i32, i32
  }
}

</mosaic_0001>

<llo_original>
// kernel: tpu_custom_call.1
$region0: #{tpu_custom_call.1}
  #allocation0 [shape = 'u32[]', space=smem, size = 0x4, offset = 0x4, fixed_abs, tag = 'smem constant byte address 0x4 - core index']
  #allocation1 [shape = 'u32[144,128]{1,0:T(1,128)}', space=vmem, size = 0x12000, scoped, tag = 'internal scratch']
  %s0 = inlined_call_operand.hbm [shape: f32[8,128], index: 0, kind: input, shape index: {}]
  %s1 = inlined_call_operand.hbm [shape: f32[8,128], index: 1, kind: input, shape index: {}]
  %s2 = inlined_call_operand.hbm [shape: f32[8,128], index: 2, kind: output, shape index: {}]
  %s3 = sld [smem:[#allocation0]]
  $region49: #{tpu_custom_call.1} parent=0
    _
  %s5 = ssub.s32 1, %s3
  %s6 = scalar_select 0, %s5, %s3
  $region1: #{tpu_custom_call.1} parent=0
    #allocation2 [shape = 'u8[4096]{0}', space=vmem, size = 0x1000, scoped, tag = 'input window, operand 0, single buffered']
    #allocation3 [shape = 's32[2]{0}', space=sflag, size = 0x8, scoped, tag = 'scoped memory for tpu_custom_call.1']
    #allocation4 [shape = 's32[2]{0}', space=sflag, size = 0x8, scoped, tag = 'scoped memory for tpu_custom_call.1']
    #allocation5 [shape = 'u8[4096]{0}', space=vmem, size = 0x1000, scoped, tag = 'input window, operand 1, single buffered']
    #allocation6 [shape = 's32[1]{0}', space=sflag, size = 0x4, scoped, tag = 'scoped memory for tpu_custom_call.1']
    #allocation7 [shape = 'u8[4096]{0}', space=vmem, size = 0x1000, scoped, tag = 'output window, operand 0, single buffered']
    %7 = vsyncpa [#allocation3], 0
    %8 = vsyncpa [#allocation6], 0
    %9 = vsyncpa [#allocation4], 0
    loop: start=0, step=1, limit=4
    $region2: #{tpu_custom_call.1} parent=1 // loop_pre_header
      _
    $region3: #{tpu_custom_call.1} parent=1 // loop_header
      %s11 = sphi 0, %s15
      %p12 = scmp.ge.s32.totalorder %s11, 4
      %s19 = sphi 0, %s19
      %s21 = sphi 0, %s19
      %s22 = sphi 0, %s21
      %s36 = sphi 0, %s22
      %s40 = sphi 0, %s40
      %s42 = sphi 0, %s40
      %s43 = sphi 0, %s42
      %s57 = sphi 0, %s43
      %s61 = sphi 0, %s61
      %s63 = sphi 0, %s61
      %s64 = sphi 0, %s63
      %s78 = sphi 0, %s64
    $region4: #{tpu_custom_call.1} parent=1 // loop_header_branch
      %14 = sbr.rel (%p12) target = $region8
    $region5: #{tpu_custom_call.1} parent=1 // loop_body
      %s16 = ssub.s32 %s11, 1
      %s17 = ssub.s32 %s11, 2
      %s18 = sadd.s32 %s11, 1
      %s20 = sadd.s32 %s19, 1
      %p23 = scmp.eq.s32.totalorder %s11, 1
      %p24 = scmp.ne.s32.totalorder %s19, %s21
      %p25 = scmp.eq.s32.totalorder %s11, 0
      %p26 = por %p24, %p25
      %p27 = scmp.ne.s32.totalorder %s19, %s21
      %p28 = scmp.eq.s32.totalorder %s16, 1
      %p29 = por %p27, %p28
      %p30 = scmp.ne.s32.totalorder %s21, %s22
      %p31 = scmp.eq.s32.totalorder %s16, 0
      %p32 = por %p30, %p31
      %p33 = scmp.ne.s32.totalorder %s21, %s22
      %p34 = scmp.eq.s32.totalorder %s17, 1
      %p35 = por %p33, %p34
      %p37 = scmp.ne.s32.totalorder %s22, %s36
      %p38 = scmp.eq.s32.totalorder %s17, 0
      %p39 = por %p37, %p38
      %s41 = sadd.s32 %s40, 1
      %p44 = scmp.eq.s32.totalorder %s11, 1
      %p45 = scmp.ne.s32.totalorder %s40, %s42
      %p46 = scmp.eq.s32.totalorder %s11, 0
      %p47 = por %p45, %p46
      %p48 = scmp.ne.s32.totalorder %s40, %s42
      %p49 = scmp.eq.s32.totalorder %s16, 1
      %p50 = por %p48, %p49
      %p51 = scmp.ne.s32.totalorder %s42, %s43
      %p52 = scmp.eq.s32.totalorder %s16, 0
      %p53 = por %p51, %p52
      %p54 = scmp.ne.s32.totalorder %s42, %s43
      %p55 = scmp.eq.s32.totalorder %s17, 1
      %p56 = por %p54, %p55
      %p58 = scmp.ne.s32.totalorder %s43, %s57
      %p59 = scmp.eq.s32.totalorder %s17, 0
      %p60 = por %p58, %p59
      %s62 = sadd.s32 %s61, 1
      %p65 = scmp.eq.s32.totalorder %s11, 1
      %p66 = scmp.ne.s32.totalorder %s61, %s63
      %p67 = scmp.eq.s32.totalorder %s11, 0
      %p68 = por %p66, %p67
      %p69 = scmp.ne.s32.totalorder %s61, %s63
      %p70 = scmp.eq.s32.totalorder %s16, 1
      %p71 = por %p69, %p70
      %p72 = scmp.ne.s32.totalorder %s63, %s64
      %p73 = scmp.eq.s32.totalorder %s16, 0
      %p74 = por %p72, %p73
      %p75 = scmp.ne.s32.totalorder %s63, %s64
      %p76 = scmp.eq.s32.totalorder %s17, 1
      %p77 = por %p75, %p76
      %p79 = scmp.ne.s32.totalorder %s64, %s78
      %p80 = scmp.eq.s32.totalorder %s17, 0
      %p81 = por %p79, %p80
      %p82 = scmp.le.s32.totalorder 1, %s11
      %p83 = scmp.lt.s32.totalorder %s11, 3
      %p84 = pnand %p82, %p83
      %p85 = pneg %p84
      // Predicated region
      $region9: #{tpu_custom_call.1} parent=5 // pred_check
        _
      $region10: #{tpu_custom_call.1} parent=5 // pred_check_branch
        %87 = sbr.rel (%p84) target = $region12
      $region11: #{tpu_custom_call.1} parent=5 // pred_region
        %s88 = ssub.s32 %s11, 1
        // Predicated region
        $region13: #{tpu_custom_call.1} parent=11 // pred_check
          %p89 = pneg %p32
        $region14: #{tpu_custom_call.1} parent=11 // pred_check_branch
          %91 = sbr.rel (%p89) target = $region16
        $region15: #{tpu_custom_call.1} parent=11 // pred_region
          %s93 = ssub.s32 128, 128
          %94 = vsyncadd [#allocation3], %s93
          %s96 = sshll.u32 [#allocation2], 4
          %s97 = int_to_ptr.vmem [resolvable:$true] %s96
          %99 = dma.hbm_to_vmem [thread:$0]  %s0, 128, %s97, [#allocation3]
        $region16: #{tpu_custom_call.1} parent=11 // pred_fallthru
          _
        // Predicated region
        $region17: #{tpu_custom_call.1} parent=11 // pred_check
          %p100 = pneg %p53
        $region18: #{tpu_custom_call.1} parent=11 // pred_check_branch
          %102 = sbr.rel (%p100) target = $region20
        $region19: #{tpu_custom_call.1} parent=11 // pred_region
          %s104 = ssub.s32 128, 128
          %105 = vsyncadd [#allocation6], %s104
          %s107 = sshll.u32 [#allocation5], 4
          %s108 = int_to_ptr.vmem [resolvable:$true] %s107
          %110 = dma.hbm_to_vmem [thread:$0]  %s1, 128, %s108, [#allocation6]
        $region20: #{tpu_custom_call.1} parent=11 // pred_fallthru
          _
      $region12: #{tpu_custom_call.1} parent=5 // pred_fallthru
        _
      %p111 = scmp.lt.s32.totalorder %s11, 2
      // Predicated region
      $region21: #{tpu_custom_call.1} parent=5 // pred_check
        %p112 = pneg %p111
      $region22: #{tpu_custom_call.1} parent=5 // pred_check_branch
        %114 = sbr.rel (%p112) target = $region24
      $region23: #{tpu_custom_call.1} parent=5 // pred_region
        _
      $region24: #{tpu_custom_call.1} parent=5 // pred_fallthru
        _
      %p115 = scmp.le.s32.totalorder 1, %s11
      %p116 = scmp.lt.s32.totalorder %s11, 3
      %p117 = pnand %p115, %p116
      %p118 = pneg %p117
      // Predicated region
      $region25: #{tpu_custom_call.1} parent=5 // pred_check
        _
      $region26: #{tpu_custom_call.1} parent=5 // pred_check_branch
        %120 = sbr.rel (%p117) target = $region28
      $region27: #{tpu_custom_call.1} parent=5 // pred_region
        %s121 = ssub.s32 %s11, 1
        // Predicated region
        $region29: #{tpu_custom_call.1} parent=27 // pred_check
          %p122 = pneg %p32
        $region30: #{tpu_custom_call.1} parent=27 // pred_check_branch
          %124 = sbr.rel (%p122) target = $region32
        $region31: #{tpu_custom_call.1} parent=27 // pred_region
          %125 = dma.done [#allocation3], 128
        $region32: #{tpu_custom_call.1} parent=27 // pred_fallthru
          _
        // Predicated region
        $region33: #{tpu_custom_call.1} parent=27 // pred_check
          %p126 = pneg %p53
        $region34: #{tpu_custom_call.1} parent=27 // pred_check_branch
          %128 = sbr.rel (%p126) target = $region36
        $region35: #{tpu_custom_call.1} parent=27 // pred_region
          %129 = dma.done [#allocation6], 128
        $region36: #{tpu_custom_call.1} parent=27 // pred_fallthru
          _
        %p130 = pneg %p32
        %p131 = pneg %p29
        %p132 = pneg %p53
        %p133 = pneg %p50
        %p134 = pneg %p74
        %p135 = pneg %p71
        %v136 = vld [vmem:[#allocation2] sm:$0xff]
        %v137 = vld [vmem:[#allocation5] sm:$0xff]
        %v138 = vadd.f32 %v136, %v137
        %139 = vst [vmem:[#allocation7] sm:$0xff] %v138
        // Predicated region
        $region37: #{tpu_custom_call.1} parent=27 // pred_check
          %p140 = pneg %p71
        $region38: #{tpu_custom_call.1} parent=27 // pred_check_branch
          %142 = sbr.rel (%p140) target = $region40
        $region39: #{tpu_custom_call.1} parent=27 // pred_region
          %s144 = ssub.s32 128, 128
          %145 = vsyncadd [#allocation4], %s144
          %s147 = sshll.u32 [#allocation7], 4
          %s148 = int_to_ptr.vmem [resolvable:$true] %s147
          %150 = dma.vmem_to_hbm [thread:$0]  %s148, 128, %s2, [#allocation4]
        $region40: #{tpu_custom_call.1} parent=27 // pred_fallthru
          _
        // Predicated region
        $region41: #{tpu_custom_call.1} parent=27 // pred_check
          %p151 = pneg %p71
        $region42: #{tpu_custom_call.1} parent=27 // pred_check_branch
          %153 = sbr.rel (%p151) target = $region44
        $region43: #{tpu_custom_call.1} parent=27 // pred_region
          %154 = dma.done [#allocation4], 128
        $region44: #{tpu_custom_call.1} parent=27 // pred_fallthru
          _
      $region28: #{tpu_custom_call.1} parent=5 // pred_fallthru
        _
      %p155 = scmp.le.s32.totalorder 2, %s11
      // Predicated region
      $region45: #{tpu_custom_call.1} parent=5 // pred_check
        %p156 = pneg %p155
      $region46: #{tpu_custom_call.1} parent=5 // pred_check_branch
        %158 = sbr.rel (%p156) target = $region48
      $region47: #{tpu_custom_call.1} parent=5 // pred_region
        %s159 = ssub.s32 %s11, 2
      $region48: #{tpu_custom_call.1} parent=5 // pred_fallthru
        _
    $region6: #{tpu_custom_call.1} parent=1 // loop_footer
      %s15 = sadd.s32 1, %s11
    $region7: #{tpu_custom_call.1} parent=1 // loop_footer_branch
      %10 = sbr.rel target = $region3
    $region8: #{tpu_custom_call.1} parent=1 // loop_exit
      _
    %160 = vsyncpa [#allocation3], 1
    %s161 = scalar_lea.sflag [#allocation3], 1
    %162 = vsyncpa %s161, 1
    %163 = vsyncpa [#allocation6], 1
    %164 = vsyncpa [#allocation4], 1
    %s165 = scalar_lea.sflag [#allocation4], 1
    %166 = vsyncpa %s165, 1

// kernel: tpu_custom_call.1
$region0: #{tpu_custom_call.1}
  #allocation0 [shape = 'u32[]', space=smem, size = 0x4, offset = 0x4, fixed_abs, tag = 'smem constant byte address 0x4 - core index']
  #allocation1 [shape = 'u32[144,128]{1,0:T(1,128)}', space=vmem, size = 0x12000, scoped, tag = 'internal scratch']
  %s0 = inlined_call_operand.hbm [shape: bf16[16,128], index: 0, kind: input, shape index: {}]
  %s1 = inlined_call_operand.hbm [shape: bf16[128,128], index: 1, kind: input, shape index: {}]
  %s2 = inlined_call_operand.vmem [shape: f32[1,128], index: 2, kind: input, shape index: {}]
  %s3 = inlined_call_operand.hbm [shape: bf16[128,128], index: 3, kind: input, shape index: {}]
  %s4 = inlined_call_operand.vmem [shape: f32[1,128], index: 4, kind: input, shape index: {}]
  %s5 = inlined_call_operand.hbm [shape: f32[16,128], index: 5, kind: output, shape index: {}]
  %s6 = sld [smem:[#allocation0]]
  $region42: #{tpu_custom_call.1} parent=0
    _
  %s8 = ssub.s32 1, %s6
  %s9 = scalar_select 0, %s8, %s6
  $region1: #{tpu_custom_call.1} parent=0
    #allocation2 [shape = 'u8[4096]{0}', space=vmem, size = 0x1000, scoped, tag = 'input window, operand 0, single buffered']
    #allocation3 [shape = 's32[1]{0}', space=sflag, size = 0x4, scoped, tag = 'scoped memory for tpu_custom_call.1']
    #allocation4 [shape = 's32[1]{0}', space=sflag, size = 0x4, scoped, tag = 'scoped memory for tpu_custom_call.1']
    #allocation5 [shape = 'u8[32768]{0}', space=vmem, size = 0x8000, scoped, tag = 'input window, operand 1, single buffered']
    #allocation6 [shape = 's32[1]{0}', space=sflag, size = 0x4, scoped, tag = 'scoped memory for tpu_custom_call.1']
    #allocation7 [shape = 'u8[32768]{0}', space=vmem, size = 0x8000, scoped, tag = 'input window, operand 3, single buffered']
    #allocation8 [shape = 'u8[8192]{0}', space=vmem, size = 0x2000, scoped, tag = 'output window, operand 0, single buffered']
    %10 = vsyncpa [#allocation3], 0
    %11 = vsyncpa [#allocation6], 0
    %12 = vsyncpa [#allocation4], 0
    // Predicated region
    $region2: #{tpu_custom_call.1} parent=1 // pred_check
      _
    $region3: #{tpu_custom_call.1} parent=1 // pred_check_branch
      %14 = sbr.rel (0) target = $region5
    $region4: #{tpu_custom_call.1} parent=1 // pred_region
      %s16 = ssub.s32 128, 128
      %17 = vsyncadd [#allocation3], %s16
      %s18 = sshll.u32 [#allocation2], 4
      %s19 = int_to_ptr.vmem [resolvable:$true] %s18
      %24 = dma.hbm_to_vmem [thread:$0]  %s0, 128, %s19, [#allocation3], 64, 64, 4
    $region5: #{tpu_custom_call.1} parent=1 // pred_fallthru
      _
    // Predicated region
    $region6: #{tpu_custom_call.1} parent=1 // pred_check
      _
    $region7: #{tpu_custom_call.1} parent=1 // pred_check_branch
      %26 = sbr.rel (0) target = $region9
    $region8: #{tpu_custom_call.1} parent=1 // pred_region
      %s28 = ssub.s32 1024, 1024
      %29 = vsyncadd [#allocation6], %s28
      %s30 = sshll.u32 [#allocation5], 4
      %s31 = int_to_ptr.vmem [resolvable:$true] %s30
      %36 = dma.hbm_to_vmem [thread:$0]  %s1, 1024, %s31, [#allocation6], 64, 64, 4
    $region9: #{tpu_custom_call.1} parent=1 // pred_fallthru
      _
    // Predicated region
    $region10: #{tpu_custom_call.1} parent=1 // pred_check
      _
    $region11: #{tpu_custom_call.1} parent=1 // pred_check_branch
      %38 = sbr.rel (0) target = $region13
    $region12: #{tpu_custom_call.1} parent=1 // pred_region
      _
    $region13: #{tpu_custom_call.1} parent=1 // pred_fallthru
      _
    // Predicated region
    $region14: #{tpu_custom_call.1} parent=1 // pred_check
      _
    $region15: #{tpu_custom_call.1} parent=1 // pred_check_branch
      %40 = sbr.rel (0) target = $region17
    $region16: #{tpu_custom_call.1} parent=1 // pred_region
      %s42 = ssub.s32 1024, 1024
      %43 = vsyncadd [#allocation6], %s42
      %s44 = sshll.u32 [#allocation7], 4
      %s45 = int_to_ptr.vmem [resolvable:$true] %s44
      %50 = dma.hbm_to_vmem [thread:$0]  %s3, 1024, %s45, [#allocation6], 64, 64, 4
    $region17: #{tpu_custom_call.1} parent=1 // pred_fallthru
      _
    // Predicated region
    $region18: #{tpu_custom_call.1} parent=1 // pred_check
      _
    $region19: #{tpu_custom_call.1} parent=1 // pred_check_branch
      %52 = sbr.rel (0) target = $region21
    $region20: #{tpu_custom_call.1} parent=1 // pred_region
      _
    $region21: #{tpu_custom_call.1} parent=1 // pred_fallthru
      _
    // Predicated region
    $region22: #{tpu_custom_call.1} parent=1 // pred_check
      _
    $region23: #{tpu_custom_call.1} parent=1 // pred_check_branch
      %54 = sbr.rel (0) target = $region25
    $region24: #{tpu_custom_call.1} parent=1 // pred_region
      %55 = dma.done [#allocation3], 128
    $region25: #{tpu_custom_call.1} parent=1 // pred_fallthru
      _
    // Predicated region
    $region26: #{tpu_custom_call.1} parent=1 // pred_check
      _
    $region27: #{tpu_custom_call.1} parent=1 // pred_check_branch
      %57 = sbr.rel (0) target = $region29
    $region28: #{tpu_custom_call.1} parent=1 // pred_region
      %58 = dma.done [#allocation6], 1024
    $region29: #{tpu_custom_call.1} parent=1 // pred_fallthru
      _
    // Predicated region
    $region30: #{tpu_custom_call.1} parent=1 // pred_check
      _
    $region31: #{tpu_custom_call.1} parent=1 // pred_check_branch
      %60 = sbr.rel (0) target = $region33
    $region32: #{tpu_custom_call.1} parent=1 // pred_region
      %61 = dma.done [#allocation6], 1024
    $region33: #{tpu_custom_call.1} parent=1 // pred_fallthru
      _
    %v63 = vld [vmem:[#allocation2] sm:$0xf]
    %v64 = vld [vmem:[#allocation2 + $0x4] sm:$0xf]
    %v65 = vld [vmem:[#allocation5] sm:$0xf]
    %v66 = vld [vmem:[#allocation5 + $0x4] sm:$0xf]
    %v67 = vld [vmem:[#allocation5 + $0x8] sm:$0xf]
    %v68 = vld [vmem:[#allocation5 + $0xc] sm:$0xf]
    %v69 = vld [vmem:[#allocation5 + $0x10] sm:$0xf]
    %v70 = vld [vmem:[#allocation5 + $0x14] sm:$0xf]
    %v71 = vld [vmem:[#allocation5 + $0x18] sm:$0xf]
    %v72 = vld [vmem:[#allocation5 + $0x1c] sm:$0xf]
    %v73 = vld [vmem:[#allocation5 + $0x20] sm:$0xf]
    %v74 = vld [vmem:[#allocation5 + $0x24] sm:$0xf]
    %v75 = vld [vmem:[#allocation5 + $0x28] sm:$0xf]
    %v76 = vld [vmem:[#allocation5 + $0x2c] sm:$0xf]
    %v77 = vld [vmem:[#allocation5 + $0x30] sm:$0xf]
    %v78 = vld [vmem:[#allocation5 + $0x34] sm:$0xf]
    %v79 = vld [vmem:[#allocation5 + $0x38] sm:$0xf]
    %v80 = vld [vmem:[#allocation5 + $0x3c] sm:$0xf]
    %v81 = vld [vmem:[%s2] sm:$0x1]
    %v83 = vlaneseq
    %v84 = vshrl.u32 %v83, 7
    %v85 = vsub.s32 0, %v84
    %v86 = vrot.slane %v81, %v85
    %v90 = vunpack.c.l.b16 %v63
    %v91 = vunpack.c.l.b16 %v64
    %v92 = vpack.c.b16 %v91, %v90
    %v110 = vunpack.c.l.b16 %v65
    %v111 = vunpack.c.l.b16 %v66
    %v112 = vunpack.c.l.b16 %v67
    %v113 = vunpack.c.l.b16 %v68
    %v114 = vunpack.c.l.b16 %v69
    %v115 = vunpack.c.l.b16 %v70
    %v116 = vunpack.c.l.b16 %v71
    %v117 = vunpack.c.l.b16 %v72
    %v118 = vunpack.c.l.b16 %v73
    %v119 = vunpack.c.l.b16 %v74
    %v120 = vunpack.c.l.b16 %v75
    %v121 = vunpack.c.l.b16 %v76
    %v122 = vunpack.c.l.b16 %v77
    %v123 = vunpack.c.l.b16 %v78
    %v124 = vunpack.c.l.b16 %v79
    %v125 = vunpack.c.l.b16 %v80
    %v126 = vpack.c.b16 %v111, %v110
    %v127 = vpack.c.b16 %v113, %v112
    %v128 = vpack.c.b16 %v115, %v114
    %v129 = vpack.c.b16 %v117, %v116
    %v130 = vpack.c.b16 %v119, %v118
    %v131 = vpack.c.b16 %v121, %v120
    %v132 = vpack.c.b16 %v123, %v122
    %v133 = vpack.c.b16 %v125, %v124
    %142 = vmatprep.subr.bf16.mxu0 0
    %143 = vmatpush1.bf16.msra.mxu0 %v126
    %144 = vmatprep.subr.bf16.mxu0 0
    %145 = vmatpush1.bf16.msra.mxu0 %v127
    %146 = vmatprep.subr.bf16.mxu0 0
    %147 = vmatpush1.bf16.msra.mxu0 %v128
    %148 = vmatprep.subr.bf16.mxu0 0
    %149 = vmatpush1.bf16.msra.mxu0 %v129
    %150 = vmatprep.subr.bf16.mxu0 0
    %151 = vmatpush1.bf16.msra.mxu0 %v130
    %152 = vmatprep.subr.bf16.mxu0 0
    %153 = vmatpush1.bf16.msra.mxu0 %v131
    %154 = vmatprep.subr.bf16.mxu0 0
    %155 = vmatpush1.bf16.msra.mxu0 %v132
    %156 = vmatprep.subr.bf16.mxu0 0
    %157 = vmatpush1.bf16.msra.mxu0 %v133
    %158 = vmatprep.subr.bf16.mxu0 0
    %159 = vmatpush1.bf16.msra.mxu0 0
    %160 = vmatprep.subr.bf16.mxu0 0
    %161 = vmatpush1.bf16.msra.mxu0 0
    %162 = vmatprep.subr.bf16.mxu0 0
    %163 = vmatpush1.bf16.msra.mxu0 0
    %164 = vmatprep.subr.bf16.mxu0 0
    %165 = vmatpush1.bf16.msra.mxu0 0
    %166 = vmatprep.subr.bf16.mxu0 0
    %167 = vmatpush1.bf16.msra.mxu0 0
    %168 = vmatprep.subr.bf16.mxu0 0
    %169 = vmatpush1.bf16.msra.mxu0 0
    %170 = vmatprep.subr.bf16.mxu0 0
    %171 = vmatpush1.bf16.msra.mxu0 0
    %172 = vmatprep.subr.bf16.mxu0 0
    %173 = vmatpush1.bf16.msra.mxu0 0
    %174 = vmatprep.mubr.bf16.mxu0 0
    %175 = vmatmul.mubr.bf16.gmra.mrb[0].mxu0 %v92
    %v176 = vpop.f32.mrb[0].mxu0
    %v177 = vadd.f32 %v86, %v176
    %v178 = vpop.f32.mrb[0].mxu0
    %v179 = vpop.f32.mrb[0].mxu0
    %v180 = vadd.f32 %v86, %v179
    %v181 = vpop.f32.mrb[0].mxu0
    %182 = vdwg.mxu0
    %v183 = vmax.f32 %v177, 0.0
    %v184 = vmax.f32 %v180, 0.0
    %v185 = vpack.c.bf16 %v184, %v183
    %v186 = vld [vmem:[#allocation7] sm:$0xf]
    %v187 = vld [vmem:[#allocation7 + $0x4] sm:$0xf]
    %v188 = vld [vmem:[#allocation7 + $0x8] sm:$0xf]
    %v189 = vld [vmem:[#allocation7 + $0xc] sm:$0xf]
    %v190 = vld [vmem:[#allocation7 + $0x10] sm:$0xf]
    %v191 = vld [vmem:[#allocation7 + $0x14] sm:$0xf]
    %v192 = vld [vmem:[#allocation7 + $0x18] sm:$0xf]
    %v193 = vld [vmem:[#allocation7 + $0x1c] sm:$0xf]
    %v194 = vld [vmem:[#allocation7 + $0x20] sm:$0xf]
    %v195 = vld [vmem:[#allocation7 + $0x24] sm:$0xf]
    %v196 = vld [vmem:[#allocation7 + $0x28] sm:$0xf]
    %v197 = vld [vmem:[#allocation7 + $0x2c] sm:$0xf]
    %v198 = vld [vmem:[#allocation7 + $0x30] sm:$0xf]
    %v199 = vld [vmem:[#allocation7 + $0x34] sm:$0xf]
    %v200 = vld [vmem:[#allocation7 + $0x38] sm:$0xf]
    %v201 = vld [vmem:[#allocation7 + $0x3c] sm:$0xf]
    %v202 = vld [vmem:[%s4] sm:$0x1]
    %v204 = vlaneseq
    %v205 = vshrl.u32 %v204, 7
    %v206 = vsub.s32 0, %v205
    %v207 = vrot.slane %v202, %v206
    %v225 = vunpack.c.l.b16 %v186
    %v226 = vunpack.c.l.b16 %v187
    %v227 = vunpack.c.l.b16 %v188
    %v228 = vunpack.c.l.b16 %v189
    %v229 = vunpack.c.l.b16 %v190
    %v230 = vunpack.c.l.b16 %v191
    %v231 = vunpack.c.l.b16 %v192
    %v232 = vunpack.c.l.b16 %v193
    %v233 = vunpack.c.l.b16 %v194
    %v234 = vunpack.c.l.b16 %v195
    %v235 = vunpack.c.l.b16 %v196
    %v236 = vunpack.c.l.b16 %v197
    %v237 = vunpack.c.l.b16 %v198
    %v238 = vunpack.c.l.b16 %v199
    %v239 = vunpack.c.l.b16 %v200
    %v240 = vunpack.c.l.b16 %v201
    %v241 = vpack.c.b16 %v226, %v225
    %v242 = vpack.c.b16 %v228, %v227
    %v243 = vpack.c.b16 %v230, %v229
    %v244 = vpack.c.b16 %v232, %v231
    %v245 = vpack.c.b16 %v234, %v233
    %v246 = vpack.c.b16 %v236, %v235
    %v247 = vpack.c.b16 %v238, %v237
    %v248 = vpack.c.b16 %v240, %v239
    %257 = vmatprep.subr.bf16.mxu0 0
    %258 = vmatpush1.bf16.msra.mxu0 %v241
    %259 = vmatprep.subr.bf16.mxu0 0
    %260 = vmatpush1.bf16.msra.mxu0 %v242
    %261 = vmatprep.subr.bf16.mxu0 0
    %262 = vmatpush1.bf16.msra.mxu0 %v243
    %263 = vmatprep.subr.bf16.mxu0 0
    %264 = vmatpush1.bf16.msra.mxu0 %v244
    %265 = vmatprep.subr.bf16.mxu0 0
    %266 = vmatpush1.bf16.msra.mxu0 %v245
    %267 = vmatprep.subr.bf16.mxu0 0
    %268 = vmatpush1.bf16.msra.mxu0 %v246
    %269 = vmatprep.subr.bf16.mxu0 0
    %270 = vmatpush1.bf16.msra.mxu0 %v247
    %271 = vmatprep.subr.bf16.mxu0 0
    %272 = vmatpush1.bf16.msra.mxu0 %v248
    %273 = vmatprep.subr.bf16.mxu0 0
    %274 = vmatpush1.bf16.msra.mxu0 0
    %275 = vmatprep.subr.bf16.mxu0 0
    %276 = vmatpush1.bf16.msra.mxu0 0
    %277 = vmatprep.subr.bf16.mxu0 0
    %278 = vmatpush1.bf16.msra.mxu0 0
    %279 = vmatprep.subr.bf16.mxu0 0
    %280 = vmatpush1.bf16.msra.mxu0 0
    %281 = vmatprep.subr.bf16.mxu0 0
    %282 = vmatpush1.bf16.msra.mxu0 0
    %283 = vmatprep.subr.bf16.mxu0 0
    %284 = vmatpush1.bf16.msra.mxu0 0
    %285 = vmatprep.subr.bf16.mxu0 0
    %286 = vmatpush1.bf16.msra.mxu0 0
    %287 = vmatprep.subr.bf16.mxu0 0
    %288 = vmatpush1.bf16.msra.mxu0 0
    %289 = vmatprep.mubr.bf16.mxu0 0
    %290 = vmatmul.mubr.bf16.gmra.mrb[0].mxu0 %v185
    %v291 = vpop.f32.mrb[0].mxu0
    %v292 = vadd.f32 %v207, %v291
    %v293 = vpop.f32.mrb[0].mxu0
    %v294 = vpop.f32.mrb[0].mxu0
    %v295 = vadd.f32 %v207, %v294
    %v296 = vpop.f32.mrb[0].mxu0
    %297 = vdwg.mxu0
    %298 = vst [vmem:[#allocation8] sm:$0xff] %v292
    %299 = vst [vmem:[#allocation8 + $0x8] sm:$0xff] %v295
    // Predicated region
    $region34: #{tpu_custom_call.1} parent=1 // pred_check
      _
    $region35: #{tpu_custom_call.1} parent=1 // pred_check_branch
      %301 = sbr.rel (0) target = $region37
    $region36: #{tpu_custom_call.1} parent=1 // pred_region
      %s303 = ssub.s32 256, 256
      %304 = vsyncadd [#allocation4], %s303
      %s305 = sshll.u32 [#allocation8], 4
      %s306 = int_to_ptr.vmem [resolvable:$true] %s305
      %311 = dma.vmem_to_hbm [thread:$0]  %s306, 256, %s5, [#allocation4], 128, 128, 8
    $region37: #{tpu_custom_call.1} parent=1 // pred_fallthru
      _
    // Predicated region
    $region38: #{tpu_custom_call.1} parent=1 // pred_check
      _
    $region39: #{tpu_custom_call.1} parent=1 // pred_check_branch
      %313 = sbr.rel (0) target = $region41
    $region40: #{tpu_custom_call.1} parent=1 // pred_region
      %314 = dma.done [#allocation4], 256
    $region41: #{tpu_custom_call.1} parent=1 // pred_fallthru
      _
    %315 = vsyncpa [#allocation3], 1
    %316 = vsyncpa [#allocation6], 1
    %317 = vsyncpa [#allocation4], 1

</llo_original>
